<compile_context>
chip_gen: v5e
topology: v5e:2x2
jax: 0.10.0
libtpu: 0.0.40
codegen_flags: <defaults>
</compile_context>

<pallas_src>
import functools

import jax
import jax.numpy as jnp
from jax.experimental import pallas as pl
from jax.experimental.pallas import tpu as pltpu

_MIB = 1024 * 1024
# ~4 live (C, HW) buffers (double-buffered in + double-buffered out): keep the
# fused path comfortably pipelined even on v7x (64 MiB VMEM per TensorCore).
_FUSED_SLAB_BUDGET = 24 * _MIB
# Stage-2 live-buffer budget (in dbl-buf + out dbl-buf) for the tiled path.
_STAGE2_TILE_BUDGET = 16 * _MIB
# Never request more scoped VMEM than is safe on v7x (64 MiB/TC).
_VMEM_LIMIT_CAP = 48 * _MIB


def _vmem_limit(live_bytes):
    """Scoped-VMEM limit: generous headroom, capped for v7x's 64 MiB/TC."""
    return int(max(16 * _MIB, min(_VMEM_LIMIT_CAP, 2 * live_bytes + 8 * _MIB)))


def _pick_hw_tile(hw, c, itemsize, budget_bytes, max_tile=4096):
    """Spatial tile width for the two-stage path.

    Returns a divisor of hw (no ragged tail), preferably a multiple of 128,
    sized so ~4 live (C, thw) buffers (stage-2 in/out double buffers) fit in
    `budget_bytes`.  Returns None if no VMEM-safe divisor exists.
    """
    per_lane_bytes = 4 * c * itemsize
    cap = budget_bytes // per_lane_bytes
    cap = int(min(cap, max_tile, hw))
    if cap < 1:
        return None
    if hw % 128 == 0 and cap >= 128:
        best = None
        for cand in range(128, (cap // 128) * 128 + 1, 128):
            if hw % cand == 0:
                best = cand
        if best is not None:
            return best
    # Ragged HW (or no multiple-of-128 divisor under the cap): largest divisor
    # of hw that still fits the budget.
    # TODO(synk): use a pl.cdiv grid with a masked last tile so the tile width
    # can always be a large multiple of 128 even for awkward HW factorizations.
    for cand in range(cap, 0, -1):
        if hw % cand == 0:
            return cand
    return None


# ----------------------------------------------------------------------------
# Fused single-pass kernel: pool + excite + rescale with the slab resident.
# ----------------------------------------------------------------------------
def _se_fused_kernel(x_ref, w1t_ref, b1_ref, w2_ref, b2_ref, o_ref, *, inv_hw):
    # x_ref block: (1, C, HW); w1t: (C, R); b1: (1, R); w2: (C, R); b2: (C, 1)
    x = x_ref[0]                                                       # (C, HW)
    # AdaptiveAvgPool2d(1): spatial mean, accumulated in f32.
    pooled = jnp.sum(x.astype(jnp.float32), axis=1, keepdims=True) * inv_hw
    # Conv2d(C -> R, 1x1): hidden[r] = sum_c w1[r, c] * pooled[c] + b1[r]
    hidden = (jnp.sum(w1t_ref[...].astype(jnp.float32) * pooled,
                      axis=0, keepdims=True)
              + b1_ref[...].astype(jnp.float32))                       # (1, R)
    hidden = hidden * jax.nn.sigmoid(hidden)                           # SiLU
    # Conv2d(R -> C, 1x1): scale[c] = sum_r w2[c, r] * hidden[r] + b2[c]
    scale = (jnp.sum(w2_ref[...].astype(jnp.float32) * hidden,
                     axis=1, keepdims=True)
             + b2_ref[...].astype(jnp.float32))                        # (C, 1)
    scale = jax.nn.sigmoid(scale)
    # Rescale in the input dtype (per-channel gate broadcast over the lanes).
    o_ref[0] = (x * scale.astype(x.dtype)).astype(o_ref.dtype)


# ----------------------------------------------------------------------------
# Two-stage fallback kernels (slab does not fit in VMEM).
# ----------------------------------------------------------------------------
def _pool_excite_kernel(x_ref, w1t_ref, b1_ref, w2_ref, b2_ref, s_ref, acc_ref,
                        *, inv_hw, thw):
    # x_ref block: (1, C, thw); acc_ref: (C, 128) [or (C, 1) for ragged tiles]
    j = pl.program_id(1)

    @pl.when(j == 0)
    def _():
        acc_ref[...] = jnp.zeros_like(acc_ref)

    x = x_ref[0]                                                       # (C, thw)
    if thw % 128 == 0:
        # Pure-VPU per-tile accumulation: elementwise adds of the thw/128 lane
        # groups into the lane-replicated (C, 128) accumulator.  The single
        # cross-lane (XLU) reduce runs once, in the last-tile epilogue.
        partial = x[:, 0:128].astype(jnp.float32)
        for k in range(1, thw // 128):
            partial = partial + x[:, k * 128:(k + 1) * 128].astype(jnp.float32)
        acc_ref[...] += partial
    else:
        acc_ref[...] += jnp.sum(x.astype(jnp.float32), axis=1, keepdims=True)

    @pl.when(j == pl.num_programs(1) - 1)
    def _():
        # Finish AdaptiveAvgPool2d(1): one cross-lane reduce + mean.
        pooled = jnp.sum(acc_ref[...], axis=1, keepdims=True) * inv_hw  # (C, 1)
        # Conv2d(C -> R, 1x1) + SiLU
        hidden = (jnp.sum(w1t_ref[...].astype(jnp.float32) * pooled,
                          axis=0, keepdims=True)
                  + b1_ref[...].astype(jnp.float32))                    # (1, R)
        hidden = hidden * jax.nn.sigmoid(hidden)
        # Conv2d(R -> C, 1x1) + Sigmoid
        scale = (jnp.sum(w2_ref[...].astype(jnp.float32) * hidden,
                         axis=1, keepdims=True)
                 + b2_ref[...].astype(jnp.float32))                     # (C, 1)
        s_ref[0] = jax.nn.sigmoid(scale)


def _rescale_kernel(x_ref, s_ref, o_ref):
    # x block (1, C, thw); s block (1, C, 1) -> lane-broadcast multiply.
    o_ref[0] = (x_ref[0] * s_ref[0]).astype(o_ref.dtype)


# ----------------------------------------------------------------------------
# Wrapper / dispatcher.
# ----------------------------------------------------------------------------
def se_block_pallas(x_nchw, w1, b1, w2, b2, *,
                    fused_budget_bytes=_FUSED_SLAB_BUDGET,
                    stage2_budget_bytes=_STAGE2_TILE_BUDGET):
    """x_nchw: (B, C, H, W).
    w1: (R, C) conv1 1x1 weight (squeezed), b1: (R,)
    w2: (C, R) conv2 1x1 weight (squeezed), b2: (C,)
    Returns (B, C, H, W) in x's dtype."""
    B, C, H, W = x_nchw.shape
    R = w1.shape[0]
    HW = H * W
    isz = x_nchw.dtype.itemsize
    inv_hw = 1.0 / float(HW)

    # Glue: free reshape only (no transpose): channels on sublanes, HW on lanes.
    # TODO(synk): for the small-HW / large-C regime (HW < 128, e.g. 7x7 late SE
    # stages) flip the layout so C sits on lanes for lane-dense stores.
    x_r = x_nchw.reshape(B, C, HW)
    w1t = w1.T                                   # (C, R)  -- tiny
    b1_row = b1.reshape(1, R)
    b2_col = b2.reshape(C, 1)
    param_bytes = int((w1t.size + b1_row.size + w2.size + b2_col.size) * 4)

    # ---- fused single-pass path: 1 HBM read + 1 HBM write of x ----
    fused_live = 4 * C * HW * isz                # in dbl-buf + out dbl-buf
    if fused_live <= fused_budget_bytes:
        cost = pl.CostEstimate(
            flops=int(B * (2 * C * HW + 4 * C * R + 4 * C)),
            transcendentals=int(B * (2 * R + C)),
            bytes_accessed=int(2 * B * C * HW * isz + param_bytes))
        out = pl.pallas_call(
            functools.partial(_se_fused_kernel, inv_hw=inv_hw),
            out_shape=jax.ShapeDtypeStruct((B, C, HW), x_r.dtype),
            grid_spec=pltpu.PrefetchScalarGridSpec(
                num_scalar_prefetch=0,
                grid=(B,),
                in_specs=[
                    pl.BlockSpec((1, C, HW), lambda b: (b, 0, 0)),   # x slab
                    pl.BlockSpec((C, R), lambda b: (0, 0)),          # w1^T
                    pl.BlockSpec((1, R), lambda b: (0, 0)),          # b1
                    pl.BlockSpec((C, R), lambda b: (0, 0)),          # w2
                    pl.BlockSpec((C, 1), lambda b: (0, 0)),          # b2
                ],
                out_specs=pl.BlockSpec((1, C, HW), lambda b: (b, 0, 0)),
            ),
            compiler_params=pltpu.CompilerParams(
                dimension_semantics=("parallel",),
                vmem_limit_bytes=_vmem_limit(fused_live + param_bytes)),
            cost_estimate=cost,
            # True in-place when the caller donates x; otherwise XLA copies.
            input_output_aliases={0: 0},
        )(x_r, w1t, b1_row, w2, b2_col)
        return out.reshape(B, C, H, W)

    # ---- two-stage fallback for slabs that do not fit in VMEM ----
    thw = _pick_hw_tile(HW, C, isz, stage2_budget_bytes)
    if thw is None:
        # TODO(synk): masked ragged-tail tiling; fall back to plain XLA so odd
        # shapes stay correct rather than over-allocating VMEM.
        return se_block_reference(x_nchw, w1, b1, w2, b2)
    nj = HW // thw
    acc_w = 128 if thw % 128 == 0 else 1
    tile_live = 4 * C * thw * isz

    # stage 1: tiled global-average-pool + excite FCs -> scale (B, C, 1)
    cost1 = pl.CostEstimate(
        flops=int(B * (C * HW + 4 * C * R + 4 * C)),
        transcendentals=int(B * (2 * R + C)),
        bytes_accessed=int(B * C * HW * isz + B * C * 4 + param_bytes))
    scale = pl.pallas_call(
        functools.partial(_pool_excite_kernel, inv_hw=inv_hw, thw=thw),
        out_shape=jax.ShapeDtypeStruct((B, C, 1), jnp.float32),
        grid_spec=pltpu.PrefetchScalarGridSpec(
            num_scalar_prefetch=0,
            grid=(B, nj),
            in_specs=[
                pl.BlockSpec((1, C, thw), lambda b, j: (b, 0, j)),   # x tile
                pl.BlockSpec((C, R), lambda b, j: (0, 0)),           # w1^T
                pl.BlockSpec((1, R), lambda b, j: (0, 0)),           # b1
                pl.BlockSpec((C, R), lambda b, j: (0, 0)),           # w2
                pl.BlockSpec((C, 1), lambda b, j: (0, 0)),           # b2
            ],
            out_specs=pl.BlockSpec((1, C, 1), lambda b, j: (b, 0, 0)),
            scratch_shapes=[pltpu.VMEM((C, acc_w), jnp.float32)],
        ),
        compiler_params=pltpu.CompilerParams(
            dimension_semantics=("parallel", "arbitrary"),
            vmem_limit_bytes=_vmem_limit(2 * C * thw * isz
                                         + C * 128 * 4 + param_bytes)),
        cost_estimate=cost1,
    )(x_r, w1t, b1_row, w2, b2_col)
    # TODO(synk): when B < 2 on v7x, shard stage-1 pooling across the two
    # TensorCores by channel blocks (pooling is channel-independent).

    # stage 2: tiled elementwise rescale (lane-dense output).
    cost2 = pl.CostEstimate(
        flops=int(B * C * HW),
        transcendentals=0,
        bytes_accessed=int(2 * B * C * HW * isz + B * C * 4))
    out = pl.pallas_call(
        _rescale_kernel,
        out_shape=jax.ShapeDtypeStruct((B, C, HW), x_r.dtype),
        grid_spec=pltpu.PrefetchScalarGridSpec(
            num_scalar_prefetch=0,
            grid=(B, nj),
            in_specs=[
                pl.BlockSpec((1, C, thw), lambda b, j: (b, 0, j)),   # x tile
                pl.BlockSpec((1, C, 1), lambda b, j: (b, 0, 0)),     # scale
            ],
            out_specs=pl.BlockSpec((1, C, thw), lambda b, j: (b, 0, j)),
        ),
        compiler_params=pltpu.CompilerParams(
            dimension_semantics=("parallel", "parallel"),
            vmem_limit_bytes=_vmem_limit(tile_live)),
        cost_estimate=cost2,
        input_output_aliases={0: 0},
    )(x_r, scale)
    return out.reshape(B, C, H, W)


def se_block_reference(x, w1, b1, w2, b2):
    """Pure-JAX reference matching the PyTorch module semantics."""
    pooled = jnp.mean(x, axis=(2, 3))                    # (B, C)
    h = pooled @ w1.T + b1                               # (B, R)
    h = h * jax.nn.sigmoid(h)                            # SiLU
    s = jax.nn.sigmoid(h @ w2.T + b2)                    # (B, C)
    return x * s[:, :, None, None]


if __name__ == "__main__":
    # SEBlock(in_channels=4, se_ratio=0.25) -> reduced = 1
    B, C, H, W = 2, 4, 16, 16
    R = max(1, int(C * 0.25))

    key = jax.random.PRNGKey(0)
    kx, k1, k2, k3, k4 = jax.random.split(key, 5)
    x = jax.random.normal(kx, (B, C, H, W), dtype=jnp.float32)

    # Deterministic synthetic parameters (conv 1x1 weights squeezed to 2-D)
    w1 = jax.random.normal(k1, (R, C), dtype=jnp.float32) * 0.5   # Conv2d(C, R, 1).weight
    b1 = jax.random.normal(k2, (R,), dtype=jnp.float32) * 0.1     # Conv2d(C, R, 1).bias
    w2 = jax.random.normal(k3, (C, R), dtype=jnp.float32) * 0.5   # Conv2d(R, C, 1).weight
    b2 = jax.random.normal(k4, (C,), dtype=jnp.float32) * 0.1     # Conv2d(R, C, 1).bias

    ref = se_block_reference(x, w1, b1, w2, b2)

    # Default dispatch -> fused single-pass kernel.
    out_fused = se_block_pallas(x, w1, b1, w2, b2)
    out_fused = jax.block_until_ready(out_fused)
    assert out_fused.shape == (B, C, H, W)
    assert jnp.allclose(out_fused, ref, atol=1e-5, rtol=1e-5), "fused mismatch"

    # Force the two-stage path (tiny budgets -> thw=128, nj=2) to validate it too.
    out_two = se_block_pallas(x, w1, b1, w2, b2,
                              fused_budget_bytes=0,
                              stage2_budget_bytes=4 * C * 4 * 128)
    out_two = jax.block_until_ready(out_two)
    assert jnp.allclose(out_two, ref, atol=1e-5, rtol=1e-5), "two-stage mismatch"

    print("KERNEL_OK")
</pallas_src>

<mosaic_0001>
module attributes {stable_mosaic.version = 11 : i64} {
  func.func @_se_fused_kernel(%arg0: i32, %arg1: memref<1x4x256xf32, #tpu.memory_space<vmem>>, %arg2: memref<4x1xf32, #tpu.memory_space<vmem>>, %arg3: memref<1x1xf32, #tpu.memory_space<vmem>>, %arg4: memref<4x1xf32, #tpu.memory_space<vmem>>, %arg5: memref<4x1xf32, #tpu.memory_space<vmem>>, %arg6: memref<1x4x256xf32, #tpu.memory_space<vmem>>) attributes {dimension_semantics = [#tpu.dimension_semantics<parallel>], iteration_bounds = array<i64: 2>, scalar_prefetch = 0 : i64, scratch_operands = 0 : i64, tpu.core_type = #tpu.core_type<tc>, window_params = [{transform_indices = @transform_0, window_bounds = array<i64: 1, 4, 256>}, {pipeline_mode = #tpu.pipeline_mode<synchronous>, transform_indices = @transform_1, window_bounds = array<i64: 4, 1>}, {pipeline_mode = #tpu.pipeline_mode<synchronous>, transform_indices = @transform_2, window_bounds = array<i64: 1, 1>}, {pipeline_mode = #tpu.pipeline_mode<synchronous>, transform_indices = @transform_3, window_bounds = array<i64: 4, 1>}, {pipeline_mode = #tpu.pipeline_mode<synchronous>, transform_indices = @transform_4, window_bounds = array<i64: 4, 1>}, {transform_indices = @transform_5, window_bounds = array<i64: 1, 4, 256>}]} {
    %c0 = arith.constant 0 : index
    %c0_0 = arith.constant 0 : index
    %c0_1 = arith.constant 0 : index
    %0 = vector.load %arg1[%c0, %c0_0, %c0_1] : memref<1x4x256xf32, #tpu.memory_space<vmem>>, vector<1x4x256xf32>
    %1 = vector.shape_cast %0 : vector<1x4x256xf32> to vector<4x256xf32>
    %cst = arith.constant dense<0.000000e+00> : vector<4xf32>
    %2 = vector.multi_reduction <add>, %1, %cst [1] : vector<4x256xf32> to vector<4xf32>
    %3 = vector.shape_cast %2 : vector<4xf32> to vector<4x1xf32>
    %cst_2 = arith.constant 3.906250e-03 : f32
    %4 = vector.broadcast %cst_2 : f32 to vector<4x1xf32>
    %5 = arith.mulf %3, %4 : vector<4x1xf32>
    %c0_3 = arith.constant 0 : index
    %c0_4 = arith.constant 0 : index
    %6 = vector.load %arg2[%c0_3, %c0_4] : memref<4x1xf32, #tpu.memory_space<vmem>>, vector<4x1xf32>
    %7 = arith.mulf %6, %5 : vector<4x1xf32>
    %cst_5 = arith.constant dense<0.000000e+00> : vector<1xf32>
    %8 = vector.multi_reduction <add>, %7, %cst_5 [0] : vector<4x1xf32> to vector<1xf32>
    %9 = vector.shape_cast %8 : vector<1xf32> to vector<1x1xf32>
    %c0_6 = arith.constant 0 : index
    %c0_7 = arith.constant 0 : index
    %10 = vector.load %arg3[%c0_6, %c0_7] : memref<1x1xf32, #tpu.memory_space<vmem>>, vector<1x1xf32>
    %11 = arith.addf %9, %10 : vector<1x1xf32>
    %12 = arith.negf %11 : vector<1x1xf32>
    %13 = math.exp %12 : vector<1x1xf32>
    %cst_8 = arith.constant 1.000000e+00 : f32
    %14 = vector.broadcast %cst_8 : f32 to vector<1x1xf32>
    %15 = arith.addf %14, %13 : vector<1x1xf32>
    %16 = arith.divf %14, %15 : vector<1x1xf32>
    %17 = arith.mulf %11, %16 : vector<1x1xf32>
    %c0_9 = arith.constant 0 : index
    %c0_10 = arith.constant 0 : index
    %18 = vector.load %arg4[%c0_9, %c0_10] : memref<4x1xf32, #tpu.memory_space<vmem>>, vector<4x1xf32>
    %19 = vector.broadcast %17 : vector<1x1xf32> to vector<4x1xf32>
    %20 = arith.mulf %18, %19 : vector<4x1xf32>
    %cst_11 = arith.constant dense<0.000000e+00> : vector<4xf32>
    %21 = vector.multi_reduction <add>, %20, %cst_11 [1] : vector<4x1xf32> to vector<4xf32>
    %22 = vector.shape_cast %21 : vector<4xf32> to vector<4x1xf32>
    %c0_12 = arith.constant 0 : index
    %c0_13 = arith.constant 0 : index
    %23 = vector.load %arg5[%c0_12, %c0_13] : memref<4x1xf32, #tpu.memory_space<vmem>>, vector<4x1xf32>
    %24 = arith.addf %22, %23 : vector<4x1xf32>
    %25 = arith.negf %24 : vector<4x1xf32>
    %26 = math.exp %25 : vector<4x1xf32>
    %cst_14 = arith.constant 1.000000e+00 : f32
    %27 = vector.broadcast %cst_14 : f32 to vector<4x1xf32>
    %28 = arith.addf %27, %26 : vector<4x1xf32>
    %29 = arith.divf %27, %28 : vector<4x1xf32>
    %30 = vector.broadcast %29 : vector<4x1xf32> to vector<4x256xf32>
    %31 = arith.mulf %1, %30 : vector<4x256xf32>
    %c0_15 = arith.constant 0 : index
    %c0_16 = arith.constant 0 : index
    %c0_17 = arith.constant 0 : index
    %32 = vector.load %arg6[%c0_15, %c0_16, %c0_17] : memref<1x4x256xf32, #tpu.memory_space<vmem>>, vector<1x4x256xf32>
    %33 = vector.shape_cast %32 : vector<1x4x256xf32> to vector<4x256xf32>
    %34 = vector.shape_cast %31 : vector<4x256xf32> to vector<1x4x256xf32>
    tpu.vector_store %arg6[%c0_15, %c0_16, %c0_17], %34 {strides = array<i32>} : memref<1x4x256xf32, #tpu.memory_space<vmem>>, vector<1x4x256xf32>,
    return
  }
  func.func @transform_0(%arg0: i32) -> (i32, i32, i32) {
    %c0_i32 = arith.constant 0 : i32
    %c0_i32_0 = arith.constant 0 : i32
    %c0_i32_1 = arith.constant 0 : i32
    return %arg0, %c0_i32, %c0_i32_0 : i32, i32, i32
  }
  func.func @transform_1(%arg0: i32) -> (i32, i32) {
    %c0_i32 = arith.constant 0 : i32
    %c0_i32_0 = arith.constant 0 : i32
    %c0_i32_1 = arith.constant 0 : i32
    return %c0_i32, %c0_i32_0 : i32, i32
  }
  func.func @transform_2(%arg0: i32) -> (i32, i32) {
    %c0_i32 = arith.constant 0 : i32
    %c0_i32_0 = arith.constant 0 : i32
    %c0_i32_1 = arith.constant 0 : i32
    return %c0_i32, %c0_i32_0 : i32, i32
  }
  func.func @transform_3(%arg0: i32) -> (i32, i32) {
    %c0_i32 = arith.constant 0 : i32
    %c0_i32_0 = arith.constant 0 : i32
    %c0_i32_1 = arith.constant 0 : i32
    return %c0_i32, %c0_i32_0 : i32, i32
  }
  func.func @transform_4(%arg0: i32) -> (i32, i32) {
    %c0_i32 = arith.constant 0 : i32
    %c0_i32_0 = arith.constant 0 : i32
    %c0_i32_1 = arith.constant 0 : i32
    return %c0_i32, %c0_i32_0 : i32, i32
  }
  func.func @transform_5(%arg0: i32) -> (i32, i32, i32) {
    %c0_i32 = arith.constant 0 : i32
    %c0_i32_0 = arith.constant 0 : i32
    %c0_i32_1 = arith.constant 0 : i32
    return %arg0, %c0_i32, %c0_i32_0 : i32, i32, i32
  }
}

</mosaic_0001>

<llo_original>
// kernel: tpu_custom_call.1
$region0: #{tpu_custom_call.1}
  #allocation0 [shape = 'u32[]', space=smem, size = 0x4, offset = 0x4, fixed_abs, tag = 'smem constant byte address 0x4 - core index']
  #allocation1 [shape = 'u32[72,128]{1,0:T(1,128)}', space=vmem, size = 0x9000, scoped, tag = 'internal scratch']
  #allocation2 [shape = 'f32[1,1]{1,0:T(1,128)S(1)}', space=vmem, size = 0x200, scoped, tag = 'scoped memory for tpu_custom_call.1']
  %s0 = inlined_call_operand.hbm [shape: f32[2,4,256], index: 0, kind: input, shape index: {}, may-alias: {0,5}]
  %s1 = inlined_call_operand.vmem [shape: f32[4,1], index: 1, kind: input, shape index: {}]
  %s2 = inlined_call_operand.<no memory space> [shape: f32[1,1], index: 2, kind: input, shape index: {}]
  %s3 = inlined_call_operand.vmem [shape: f32[4,1], index: 3, kind: input, shape index: {}]
  %s4 = inlined_call_operand.vmem [shape: f32[4,1], index: 4, kind: input, shape index: {}]
  %s5 = inlined_call_operand.hbm [shape: f32[2,4,256], index: 5, kind: output, shape index: {}, may-alias: {0,5}]
  %s6 = sld [smem:[#allocation0]]
  $region57: #{tpu_custom_call.1} parent=0
    _
  %s8 = ssub.s32 1, %s6
  %s9 = scalar_select 0, %s8, %s6
  %v10 = vstv %s2
  %11 = vst [vmem:[#allocation2] sm:$0x1] %v10
  $region1: #{tpu_custom_call.1} parent=0
    #allocation3 [shape = 'u8[8192]{0}', space=vmem, size = 0x2000, scoped, tag = 'input window, operand 0']
    #allocation4 [shape = 's32[2]{0}', space=sflag, size = 0x8, scoped, tag = 'scoped memory for tpu_custom_call.1']
    #allocation5 [shape = 's32[2]{0}', space=sflag, size = 0x8, scoped, tag = 'scoped memory for tpu_custom_call.1']
    #allocation6 [shape = 'u8[8192]{0}', space=vmem, size = 0x2000, scoped, tag = 'output window, operand 0']
    %12 = vsyncpa [#allocation4], 0
    %s13 = scalar_lea.sflag [#allocation4], 1
    %14 = vsyncpa %s13, 0
    %15 = vsyncpa [#allocation5], 0
    %s16 = scalar_lea.sflag [#allocation5], 1
    %17 = vsyncpa %s16, 0
    loop: start=0, step=1, limit=4
    $region2: #{tpu_custom_call.1} parent=1 // loop_pre_header
      _
    $region3: #{tpu_custom_call.1} parent=1 // loop_header
      %s19 = sphi 0, %s23
      %p20 = scmp.ge.s32.totalorder %s19, 4
      %s29 = sphi 0, %s31
      %s32 = sphi 0, %s29
      %s33 = sphi 0, %s32
      %s49 = sphi 0, %s33
      %s53 = sphi 0, %s53
      %s55 = sphi 0, %s53
      %s56 = sphi 0, %s55
      %s70 = sphi 0, %s56
      %s74 = sphi 0, %s74
      %s76 = sphi 0, %s74
      %s77 = sphi 0, %s76
      %s91 = sphi 0, %s77
      %s95 = sphi 0, %s95
      %s97 = sphi 0, %s95
      %s98 = sphi 0, %s97
      %s112 = sphi 0, %s98
      %s116 = sphi 0, %s116
      %s118 = sphi 0, %s116
      %s119 = sphi 0, %s118
      %s133 = sphi 0, %s119
      %s139 = sphi 0, %s141
      %s142 = sphi 0, %s139
      %s143 = sphi 0, %s142
      %s159 = sphi 0, %s143
    $region4: #{tpu_custom_call.1} parent=1 // loop_header_branch
      %22 = sbr.rel (%p20) target = $region8
    $region5: #{tpu_custom_call.1} parent=1 // loop_body
      %s24 = ssub.s32 %s19, 1
      %s25 = ssub.s32 %s19, 2
      %s26 = sadd.s32 %s19, 1
      %s27 = ssub.s32 %s19, %s26
      %p28 = scmp.eq.s32.totalorder %s27, 0
      %s30 = sadd.s32 %s29, 1
      %s31 = scalar_select %p28, %s29, %s30
      %p34 = pneg %p28
      %p35 = scmp.eq.s32.totalorder %s19, 1
      %p36 = por %p34, %p35
      %p37 = scmp.ne.s32.totalorder %s29, %s32
      %p38 = scmp.eq.s32.totalorder %s19, 0
      %p39 = por %p37, %p38
      %p40 = scmp.ne.s32.totalorder %s29, %s32
      %p41 = scmp.eq.s32.totalorder %s24, 1
      %p42 = por %p40, %p41
      %p43 = scmp.ne.s32.totalorder %s32, %s33
      %p44 = scmp.eq.s32.totalorder %s24, 0
      %p45 = por %p43, %p44
      %p46 = scmp.ne.s32.totalorder %s32, %s33
      %p47 = scmp.eq.s32.totalorder %s25, 1
      %p48 = por %p46, %p47
      %p50 = scmp.ne.s32.totalorder %s33, %s49
      %p51 = scmp.eq.s32.totalorder %s25, 0
      %p52 = por %p50, %p51
      %s54 = sadd.s32 %s53, 1
      %p57 = scmp.eq.s32.totalorder %s19, 1
      %p58 = scmp.ne.s32.totalorder %s53, %s55
      %p59 = scmp.eq.s32.totalorder %s19, 0
      %p60 = por %p58, %p59
      %p61 = scmp.ne.s32.totalorder %s53, %s55
      %p62 = scmp.eq.s32.totalorder %s24, 1
      %p63 = por %p61, %p62
      %p64 = scmp.ne.s32.totalorder %s55, %s56
      %p65 = scmp.eq.s32.totalorder %s24, 0
      %p66 = por %p64, %p65
      %p67 = scmp.ne.s32.totalorder %s55, %s56
      %p68 = scmp.eq.s32.totalorder %s25, 1
      %p69 = por %p67, %p68
      %p71 = scmp.ne.s32.totalorder %s56, %s70
      %p72 = scmp.eq.s32.totalorder %s25, 0
      %p73 = por %p71, %p72
      %s75 = sadd.s32 %s74, 1
      %p78 = scmp.eq.s32.totalorder %s19, 1
      %p79 = scmp.ne.s32.totalorder %s74, %s76
      %p80 = scmp.eq.s32.totalorder %s19, 0
      %p81 = por %p79, %p80
      %p82 = scmp.ne.s32.totalorder %s74, %s76
      %p83 = scmp.eq.s32.totalorder %s24, 1
      %p84 = por %p82, %p83
      %p85 = scmp.ne.s32.totalorder %s76, %s77
      %p86 = scmp.eq.s32.totalorder %s24, 0
      %p87 = por %p85, %p86
      %p88 = scmp.ne.s32.totalorder %s76, %s77
      %p89 = scmp.eq.s32.totalorder %s25, 1
      %p90 = por %p88, %p89
      %p92 = scmp.ne.s32.totalorder %s77, %s91
      %p93 = scmp.eq.s32.totalorder %s25, 0
      %p94 = por %p92, %p93
      %s96 = sadd.s32 %s95, 1
      %p99 = scmp.eq.s32.totalorder %s19, 1
      %p100 = scmp.ne.s32.totalorder %s95, %s97
      %p101 = scmp.eq.s32.totalorder %s19, 0
      %p102 = por %p100, %p101
      %p103 = scmp.ne.s32.totalorder %s95, %s97
      %p104 = scmp.eq.s32.totalorder %s24, 1
      %p105 = por %p103, %p104
      %p106 = scmp.ne.s32.totalorder %s97, %s98
      %p107 = scmp.eq.s32.totalorder %s24, 0
      %p108 = por %p106, %p107
      %p109 = scmp.ne.s32.totalorder %s97, %s98
      %p110 = scmp.eq.s32.totalorder %s25, 1
      %p111 = por %p109, %p110
      %p113 = scmp.ne.s32.totalorder %s98, %s112
      %p114 = scmp.eq.s32.totalorder %s25, 0
      %p115 = por %p113, %p114
      %s117 = sadd.s32 %s116, 1
      %p120 = scmp.eq.s32.totalorder %s19, 1
      %p121 = scmp.ne.s32.totalorder %s116, %s118
      %p122 = scmp.eq.s32.totalorder %s19, 0
      %p123 = por %p121, %p122
      %p124 = scmp.ne.s32.totalorder %s116, %s118
      %p125 = scmp.eq.s32.totalorder %s24, 1
      %p126 = por %p124, %p125
      %p127 = scmp.ne.s32.totalorder %s118, %s119
      %p128 = scmp.eq.s32.totalorder %s24, 0
      %p129 = por %p127, %p128
      %p130 = scmp.ne.s32.totalorder %s118, %s119
      %p131 = scmp.eq.s32.totalorder %s25, 1
      %p132 = por %p130, %p131
      %p134 = scmp.ne.s32.totalorder %s119, %s133
      %p135 = scmp.eq.s32.totalorder %s25, 0
      %p136 = por %p134, %p135
      %s137 = ssub.s32 %s19, %s26
      %p138 = scmp.eq.s32.totalorder %s137, 0
      %s140 = sadd.s32 %s139, 1
      %s141 = scalar_select %p138, %s139, %s140
      %p144 = pneg %p138
      %p145 = scmp.eq.s32.totalorder %s19, 1
      %p146 = por %p144, %p145
      %p147 = scmp.ne.s32.totalorder %s139, %s142
      %p148 = scmp.eq.s32.totalorder %s19, 0
      %p149 = por %p147, %p148
      %p150 = scmp.ne.s32.totalorder %s139, %s142
      %p151 = scmp.eq.s32.totalorder %s24, 1
      %p152 = por %p150, %p151
      %p153 = scmp.ne.s32.totalorder %s142, %s143
      %p154 = scmp.eq.s32.totalorder %s24, 0
      %p155 = por %p153, %p154
      %p156 = scmp.ne.s32.totalorder %s142, %s143
      %p157 = scmp.eq.s32.totalorder %s25, 1
      %p158 = por %p156, %p157
      %p160 = scmp.ne.s32.totalorder %s143, %s159
      %p161 = scmp.eq.s32.totalorder %s25, 0
      %p162 = por %p160, %p161
      %p163 = scmp.le.s32.totalorder 1, %s19
      %p164 = scmp.lt.s32.totalorder %s19, 3
      %p165 = pnand %p163, %p164
      %p166 = pneg %p165
      // Predicated region
      $region9: #{tpu_custom_call.1} parent=5 // pred_check
        _
      $region10: #{tpu_custom_call.1} parent=5 // pred_check_branch
        %168 = sbr.rel (%p165) target = $region12
      $region11: #{tpu_custom_call.1} parent=5 // pred_region
        %s169 = ssub.s32 %s19, 1
        // Predicated region
        $region13: #{tpu_custom_call.1} parent=11 // pred_check
          %p170 = pneg %p66
        $region14: #{tpu_custom_call.1} parent=11 // pred_check_branch
          %172 = sbr.rel (%p170) target = $region16
        $region15: #{tpu_custom_call.1} parent=11 // pred_region
          _
        $region16: #{tpu_custom_call.1} parent=11 // pred_fallthru
          _
        // Predicated region
        $region17: #{tpu_custom_call.1} parent=11 // pred_check
          %p173 = pneg %p87
        $region18: #{tpu_custom_call.1} parent=11 // pred_check_branch
          %175 = sbr.rel (%p173) target = $region20
        $region19: #{tpu_custom_call.1} parent=11 // pred_region
          _
        $region20: #{tpu_custom_call.1} parent=11 // pred_fallthru
          _
        // Predicated region
        $region21: #{tpu_custom_call.1} parent=11 // pred_check
          %p176 = pneg %p108
        $region22: #{tpu_custom_call.1} parent=11 // pred_check_branch
          %178 = sbr.rel (%p176) target = $region24
        $region23: #{tpu_custom_call.1} parent=11 // pred_region
          _
        $region24: #{tpu_custom_call.1} parent=11 // pred_fallthru
          _
        // Predicated region
        $region25: #{tpu_custom_call.1} parent=11 // pred_check
          %p179 = pneg %p129
        $region26: #{tpu_custom_call.1} parent=11 // pred_check_branch
          %181 = sbr.rel (%p179) target = $region28
        $region27: #{tpu_custom_call.1} parent=11 // pred_region
          _
        $region28: #{tpu_custom_call.1} parent=11 // pred_fallthru
          _
      $region12: #{tpu_custom_call.1} parent=5 // pred_fallthru
        _
      %p182 = scmp.lt.s32.totalorder %s19, 2
      // Predicated region
      $region29: #{tpu_custom_call.1} parent=5 // pred_check
        %p183 = pneg %p182
      $region30: #{tpu_custom_call.1} parent=5 // pred_check_branch
        %185 = sbr.rel (%p183) target = $region32
      $region31: #{tpu_custom_call.1} parent=5 // pred_region
        // Predicated region
        $region33: #{tpu_custom_call.1} parent=31 // pred_check
          %p186 = pneg %p39
        $region34: #{tpu_custom_call.1} parent=31 // pred_check_branch
          %188 = sbr.rel (%p186) target = $region36
        $region35: #{tpu_custom_call.1} parent=31 // pred_region
          %s189 = sand.u32 %s29, 1
          %s190 = scalar_lea.sflag [#allocation4], %s189
          %s191 = sand.u32 %s29, 1
          %s192 = smul.addr %s191, 8
          %s193 = scalar_lea.vmem [#allocation3], %s192
          %195 = vsyncadd %s190, 0
          %s196 = smul.addr %s19, 2
          %s197 = smul.addr %s196, 4
          %s198 = scalar_lea.hbm %s0, %s197
          %s200 = sshll.u32 %s198, 4
          %s201 = int_to_ptr.hbm [resolvable:$true] %s200
          %s202 = sshll.u32 %s193, 4
          %s203 = int_to_ptr.vmem [resolvable:$true] %s202
          %205 = dma.hbm_to_vmem [thread:$0]  %s201, 128, %s203, %s190
        $region36: #{tpu_custom_call.1} parent=31 // pred_fallthru
          _
      $region32: #{tpu_custom_call.1} parent=5 // pred_fallthru
        _
      %p206 = scmp.le.s32.totalorder 1, %s19
      %p207 = scmp.lt.s32.totalorder %s19, 3
      %p208 = pnand %p206, %p207
      %p209 = pneg %p208
      // Predicated region
      $region37: #{tpu_custom_call.1} parent=5 // pred_check
        _
      $region38: #{tpu_custom_call.1} parent=5 // pred_check_branch
        %211 = sbr.rel (%p208) target = $region40
      $region39: #{tpu_custom_call.1} parent=5 // pred_region
        %s212 = ssub.s32 %s19, 1
        %s213 = sand.u32 %s32, 1
        %s214 = scalar_lea.sflag [#allocation4], %s213
        %s215 = sand.u32 %s32, 1
        %s216 = smul.addr %s215, 8
        %s217 = scalar_lea.vmem [#allocation3], %s216
        // Predicated region
        $region41: #{tpu_custom_call.1} parent=39 // pred_check
          %p218 = pneg %p45
        $region42: #{tpu_custom_call.1} parent=39 // pred_check_branch
          %220 = sbr.rel (%p218) target = $region44
        $region43: #{tpu_custom_call.1} parent=39 // pred_region
          %222 = dma.done %s214, 128
        $region44: #{tpu_custom_call.1} parent=39 // pred_fallthru
          _
        %s223 = sand.u32 %s32, 1
        %s224 = scalar_lea.sflag [#allocation4], %s223
        %s225 = sand.u32 %s32, 1
        %s226 = smul.addr %s225, 8
        %s227 = scalar_lea.vmem [#allocation3], %s226
        %p228 = pneg %p45
        %p229 = pneg %p42
        %p230 = pneg %p66
        %p231 = pneg %p63
        %p232 = pneg %p87
        %p233 = pneg %p84
        %p234 = pneg %p108
        %p235 = pneg %p105
        %p236 = pneg %p129
        %p237 = pneg %p126
        %p238 = pneg %p155
        %p239 = pneg %p152
        %s240 = sand.u32 %s142, 1
        %s241 = scalar_lea.sflag [#allocation5], %s240
        %s242 = sand.u32 %s142, 1
        %s243 = smul.addr %s242, 8
        %s244 = scalar_lea.vmem [#allocation6], %s243
        %v245 = vld [vmem:[%s217] sm:$0xff]
        %247 = vst [vmem:[#allocation1] ss:$2 sm:$0xff] %v245
        %v248 = vld.sshfl [vmem:[#allocation1] sm:$0xff pattern:$0x75316420]
        %v249 = vld.sshfl [vmem:[#allocation1 + $0x8] sm:$0xff pattern:$0x75316420]
        %vm252 = vcmask 1043456
        %v253 = vsel %vm252, %v248, 0.0
        %v254 = vsel %vm252, %v249, 0.0
        %v255 = vadd.f32 %v253, %v254
        %256 = vadd.xlane.f32.xlu0 %v255
        %v257 = vpop.xlane.xlu0 %256
        %v258 = vmul.f32 %v257, 0.00390625
        %v259 = vld [vmem:[%s1] sm:$0xf]
        %v260 = vmul.f32 %v259, %v258
        %vm261 = vcmask 3072
        %v262 = vsel %vm261, %v260, 0.0
        %v263 = vrot.slane %v262, 4
        %v264 = vadd.f32 %v262, %v263
        %v265 = vrot.slane %v264, 2
        %v266 = vadd.f32 %v264, %v265
        %v267 = vrot.slane %v266, 1
        %v268 = vadd.f32 %v266, %v267
        %v269 = vld [vmem:[#allocation2] sm:$0x1]
        %v270 = vadd.f32 %v268, %v269
        %v271 = vxor.u32 %v270, 2147483648
        %v272 = vmul.f32 %v271, 1.442695
        %v273 = vpow.pop %v272
        %v274 = vadd.f32 %v273, 1.0
        %v275 = vrcp.pop %v274
        %v276 = vmul.f32 %v274, %v275
        %v277 = vsub.f32 1.0, %v276
        %v278 = vmul.f32 %v275, %v277
        %v279 = vadd.f32 %v275, %v278
        %vm280 = vweird.f32 %v274
        %vm281 = vweird.f32 %v275
        %vm282 = vmor %vm280, %vm281
        %v283 = vsel %vm282, %v275, %v279
        %v284 = vand.u32 2147483647, %v274
        %vm285 = vcmp.eq.f32.partialorder %v284, 8.507059e+37
        %v286 = vand.u32 %v274, 2147483648
        %v287 = vor.u32 1.1754944e-38, %v286
        %v288 = vsel %vm285, %v287, %v283
        %v289 = vmul.f32 1.0, %v288
        %v290 = vmul.f32 %v270, %v289
        %v291 = vld [vmem:[%s3] sm:$0xf]
        %v292 = vperm.slane %v290, 0
        %v293 = vmul.f32 %v291, %v292
        %v294 = vadd.f32 %v293, 0.0
        %v295 = vld [vmem:[%s4] sm:$0xf]
        %v296 = vadd.f32 %v294, %v295
        %v297 = vxor.u32 %v296, 2147483648
        %v298 = vmul.f32 %v297, 1.442695
        %v299 = vpow.pop %v298
        %v300 = vadd.f32 %v299, 1.0
        %v301 = vrcp.pop %v300
        %v302 = vmul.f32 %v300, %v301
        %v303 = vsub.f32 1.0, %v302
        %v304 = vmul.f32 %v301, %v303
        %v305 = vadd.f32 %v301, %v304
        %vm306 = vweird.f32 %v300
        %vm307 = vweird.f32 %v301
        %vm308 = vmor %vm306, %vm307
        %v309 = vsel %vm308, %v301, %v305
        %v310 = vand.u32 2147483647, %v300
        %vm311 = vcmp.eq.f32.partialorder %v310, 8.507059e+37
        %v312 = vand.u32 %v300, 2147483648
        %v313 = vor.u32 1.1754944e-38, %v312
        %v314 = vsel %vm311, %v313, %v309
        %v315 = vmul.f32 1.0, %v314
        %317 = vset.pattern.permute.xlu0 0
        %318 = vperm.xlu0 %317, %v315
        %v319 = vpop.permute.xlu0 %318
        %v321 = vunpack.c.l.s4 839922192
        %v322 = vunpack.c.0.s8 %v321
        %v323 = vperm.slane %v319, %v322
        %v325 = vmul.f32 %v245, %v323
        %326 = vst [vmem:[%s244] sm:$0xff] %v325
        %s327 = sand.u32 %s142, 1
        %s328 = scalar_lea.sflag [#allocation5], %s327
        %s329 = sand.u32 %s142, 1
        %s330 = smul.addr %s329, 8
        %s331 = scalar_lea.vmem [#allocation6], %s330
        // Predicated region
        $region45: #{tpu_custom_call.1} parent=39 // pred_check
          %p332 = pneg %p152
        $region46: #{tpu_custom_call.1} parent=39 // pred_check_branch
          %334 = sbr.rel (%p332) target = $region48
        $region47: #{tpu_custom_call.1} parent=39 // pred_region
          %336 = vsyncadd %s328, 0
          %s337 = smul.addr %s24, 2
          %s338 = smul.addr %s337, 4
          %s339 = scalar_lea.hbm %s5, %s338
          %s341 = sshll.u32 %s331, 4
          %s342 = int_to_ptr.vmem [resolvable:$true] %s341
          %s343 = sshll.u32 %s339, 4
          %s344 = int_to_ptr.hbm [resolvable:$true] %s343
          %346 = dma.vmem_to_hbm [thread:$0]  %s342, 128, %s344, %s328
        $region48: #{tpu_custom_call.1} parent=39 // pred_fallthru
          _
      $region40: #{tpu_custom_call.1} parent=5 // pred_fallthru
        _
      %p347 = scmp.le.s32.totalorder 2, %s19
      // Predicated region
      $region49: #{tpu_custom_call.1} parent=5 // pred_check
        %p348 = pneg %p347
      $region50: #{tpu_custom_call.1} parent=5 // pred_check_branch
        %350 = sbr.rel (%p348) target = $region52
      $region51: #{tpu_custom_call.1} parent=5 // pred_region
        %s351 = ssub.s32 %s19, 2
        // Predicated region
        $region53: #{tpu_custom_call.1} parent=51 // pred_check
          %p352 = pneg %p158
        $region54: #{tpu_custom_call.1} parent=51 // pred_check_branch
          %354 = sbr.rel (%p352) target = $region56
        $region55: #{tpu_custom_call.1} parent=51 // pred_region
          %s355 = sand.u32 %s143, 1
          %s356 = scalar_lea.sflag [#allocation5], %s355
          %s357 = sand.u32 %s143, 1
          %s358 = smul.addr %s357, 8
          %s359 = scalar_lea.vmem [#allocation6], %s358
          %361 = dma.done %s356, 128
        $region56: #{tpu_custom_call.1} parent=51 // pred_fallthru
          _
      $region52: #{tpu_custom_call.1} parent=5 // pred_fallthru
        _
    $region6: #{tpu_custom_call.1} parent=1 // loop_footer
      %s23 = sadd.s32 1, %s19
    $region7: #{tpu_custom_call.1} parent=1 // loop_footer_branch
      %18 = sbr.rel target = $region3
    $region8: #{tpu_custom_call.1} parent=1 // loop_exit
      _
    %362 = vsyncpa [#allocation4], 1
    %s363 = scalar_lea.sflag [#allocation4], 1
    %364 = vsyncpa %s363, 1
    %365 = vsyncpa [#allocation5], 1
    %s366 = scalar_lea.sflag [#allocation5], 1
    %367 = vsyncpa %s366, 1

</llo_original>
